<compile_context>
chip_gen: v6e
topology: v6e:2x2x1
jax: 0.10.0
libtpu: 0.0.40
codegen_flags: <defaults>
</compile_context>

<pallas_src>
import jax
import jax.numpy as jnp
from jax.experimental import pallas as pl
from jax.experimental.pallas import tpu as pltpu


def _genre_encoder_kernel(idx_ref, table_ref, out_ref):
    # idx_ref:   (bs_pad,) int32 in SMEM (scalar prefetch).
    # table_ref: (num_embed, embed_dim) VMEM-resident embedding table.
    # out_ref:   (tb, embed_dim) output tile for this batch tile.
    tb = out_ref.shape[0]
    base = pl.program_id(0) * tb

    # tb is a static Python int and the body is two tiny independent ops, so a
    # static unrolled loop is fine (no growing live ranges).
    for i in range(tb):
        row = idx_ref[base + i]                        # scalar read from SMEM
        out_ref[pl.ds(i, 1), :] = table_ref[pl.ds(row, 1), :]  # exact row copy


def genre_encoder(genre, embed_table, *, tb=None):
    """genre: (bs, num_embed) one-hot; embed_table: (num_embed, embed_dim).
    Returns (bs, 1, embed_dim) with the dtype of `embed_table`."""
    bs, num_embed = genre.shape
    num_embed_t, embed_dim = embed_table.shape
    assert num_embed == num_embed_t

    # One-hot -> row index (matches PyTorch `nonzero` for strict one-hot rows).
    # The one-hot input has to be read once anyway; this is the minimal
    # wrapper-side HBM traffic, and only indices (4 B/row) enter the kernel.
    genre_idx = jnp.argmax(genre, axis=-1).astype(jnp.int32)

    # Batch-tile size: multiple of 8 (sublane-dense output blocks), capped at
    # 128 rows per grid step.
    if tb is None:
        tb = max(8, min(128, ((bs + 7) // 8) * 8))
    bs_pad = pl.cdiv(bs, tb) * tb
    if bs_pad != bs:
        # Padded rows gather table row 0 and are sliced off below.
        genre_idx = jnp.pad(genre_idx, (0, bs_pad - bs))

    out = pl.pallas_call(
        _genre_encoder_kernel,
        out_shape=jax.ShapeDtypeStruct((bs_pad, embed_dim), embed_table.dtype),
        grid_spec=pltpu.PrefetchScalarGridSpec(
            num_scalar_prefetch=1,
            grid=(bs_pad // tb,),
            in_specs=[
                # Full table, same block every step -> DMA'd once, VMEM-resident.
                pl.BlockSpec((num_embed, embed_dim), lambda b, idx_ref: (0, 0)),
            ],
            out_specs=pl.BlockSpec((tb, embed_dim), lambda b, idx_ref: (b, 0)),
        ),
        compiler_params=pltpu.CompilerParams(
            dimension_semantics=("parallel",),
        ),
    )(genre_idx, embed_table)

    # (bs_pad, embed_dim) -> (bs, 1, embed_dim)
    return out[:bs, None, :]


if __name__ == "__main__":
    key = jax.random.PRNGKey(0)

    # config = {'num_embed': 10, 'embed_dim': 32}
    num_embed = 10
    embed_dim = 32
    bs = 2

    k_emb, k_idx = jax.random.split(key)

    # nn.Embedding weight init ~ N(0, 1), matching PyTorch defaults.
    embed_table = jax.random.normal(k_emb, (num_embed, embed_dim), dtype=jnp.float32)

    # Build one-hot genre input (bs, num_embed).
    genre_idx = jax.random.randint(k_idx, (bs,), 0, num_embed)
    genre = jax.nn.one_hot(genre_idx, num_embed, dtype=jnp.float32)

    genre_emb = genre_encoder(genre, embed_table)
    genre_emb = jax.block_until_ready(genre_emb)

    # Reference check: plain gather (the kernel is a pure copy -> bit exact).
    ref = embed_table[genre_idx][:, None, :]
    assert genre_emb.shape == (bs, 1, embed_dim)
    assert jnp.allclose(genre_emb, ref), "mismatch vs reference gather"

    print("KERNEL_OK")
</pallas_src>

<mosaic_0001>
module attributes {stable_mosaic.version = 11 : i64} {
  func.func @_genre_encoder_kernel(%arg0: i32, %arg1: memref<8xi32, #tpu.memory_space<smem>>, %arg2: memref<10x32xf32, #tpu.memory_space<vmem>>, %arg3: memref<8x32xf32, #tpu.memory_space<vmem>>) attributes {dimension_semantics = [#tpu.dimension_semantics<parallel>], iteration_bounds = array<i64: 1>, scalar_prefetch = 1 : i64, scratch_operands = 0 : i64, tpu.core_type = #tpu.core_type<tc>, window_params = [{pipeline_mode = #tpu.pipeline_mode<synchronous>, transform_indices = @transform_0, window_bounds = array<i64: 10, 32>}, {transform_indices = @transform_1, window_bounds = array<i64: 8, 32>}]} {
    %c8_i32 = arith.constant 8 : i32
    %0 = arith.muli %arg0, %c8_i32 : i32
    %c0_i32 = arith.constant 0 : i32
    %1 = arith.addi %0, %c0_i32 : i32
    %2 = arith.index_cast %1 : i32 to index
    %3 = memref.load %arg1[%2] : memref<8xi32, #tpu.memory_space<smem>>
    %4 = arith.index_cast %3 : i32 to index
    %c0 = arith.constant 0 : index
    %5 = vector.load %arg2[%4, %c0] : memref<10x32xf32, #tpu.memory_space<vmem>>, vector<1x32xf32>
    %c0_0 = arith.constant 0 : index
    %c0_1 = arith.constant 0 : index
    %6 = vector.load %arg3[%c0_0, %c0_1] : memref<8x32xf32, #tpu.memory_space<vmem>>, vector<1x32xf32>
    tpu.vector_store %arg3[%c0_0, %c0_1], %5 {strides = array<i32>} : memref<8x32xf32, #tpu.memory_space<vmem>>, vector<1x32xf32>,
    %c1_i32 = arith.constant 1 : i32
    %7 = arith.addi %0, %c1_i32 : i32
    %8 = arith.index_cast %7 : i32 to index
    %9 = memref.load %arg1[%8] : memref<8xi32, #tpu.memory_space<smem>>
    %10 = arith.index_cast %9 : i32 to index
    %c0_2 = arith.constant 0 : index
    %11 = vector.load %arg2[%10, %c0_2] : memref<10x32xf32, #tpu.memory_space<vmem>>, vector<1x32xf32>
    %c1 = arith.constant 1 : index
    %c0_3 = arith.constant 0 : index
    %12 = vector.load %arg3[%c1, %c0_3] : memref<8x32xf32, #tpu.memory_space<vmem>>, vector<1x32xf32>
    tpu.vector_store %arg3[%c1, %c0_3], %11 {strides = array<i32>} : memref<8x32xf32, #tpu.memory_space<vmem>>, vector<1x32xf32>,
    %c2_i32 = arith.constant 2 : i32
    %13 = arith.addi %0, %c2_i32 : i32
    %14 = arith.index_cast %13 : i32 to index
    %15 = memref.load %arg1[%14] : memref<8xi32, #tpu.memory_space<smem>>
    %16 = arith.index_cast %15 : i32 to index
    %c0_4 = arith.constant 0 : index
    %17 = vector.load %arg2[%16, %c0_4] : memref<10x32xf32, #tpu.memory_space<vmem>>, vector<1x32xf32>
    %c2 = arith.constant 2 : index
    %c0_5 = arith.constant 0 : index
    %18 = vector.load %arg3[%c2, %c0_5] : memref<8x32xf32, #tpu.memory_space<vmem>>, vector<1x32xf32>
    tpu.vector_store %arg3[%c2, %c0_5], %17 {strides = array<i32>} : memref<8x32xf32, #tpu.memory_space<vmem>>, vector<1x32xf32>,
    %c3_i32 = arith.constant 3 : i32
    %19 = arith.addi %0, %c3_i32 : i32
    %20 = arith.index_cast %19 : i32 to index
    %21 = memref.load %arg1[%20] : memref<8xi32, #tpu.memory_space<smem>>
    %22 = arith.index_cast %21 : i32 to index
    %c0_6 = arith.constant 0 : index
    %23 = vector.load %arg2[%22, %c0_6] : memref<10x32xf32, #tpu.memory_space<vmem>>, vector<1x32xf32>
    %c3 = arith.constant 3 : index
    %c0_7 = arith.constant 0 : index
    %24 = vector.load %arg3[%c3, %c0_7] : memref<8x32xf32, #tpu.memory_space<vmem>>, vector<1x32xf32>
    tpu.vector_store %arg3[%c3, %c0_7], %23 {strides = array<i32>} : memref<8x32xf32, #tpu.memory_space<vmem>>, vector<1x32xf32>,
    %c4_i32 = arith.constant 4 : i32
    %25 = arith.addi %0, %c4_i32 : i32
    %26 = arith.index_cast %25 : i32 to index
    %27 = memref.load %arg1[%26] : memref<8xi32, #tpu.memory_space<smem>>
    %28 = arith.index_cast %27 : i32 to index
    %c0_8 = arith.constant 0 : index
    %29 = vector.load %arg2[%28, %c0_8] : memref<10x32xf32, #tpu.memory_space<vmem>>, vector<1x32xf32>
    %c4 = arith.constant 4 : index
    %c0_9 = arith.constant 0 : index
    %30 = vector.load %arg3[%c4, %c0_9] : memref<8x32xf32, #tpu.memory_space<vmem>>, vector<1x32xf32>
    tpu.vector_store %arg3[%c4, %c0_9], %29 {strides = array<i32>} : memref<8x32xf32, #tpu.memory_space<vmem>>, vector<1x32xf32>,
    %c5_i32 = arith.constant 5 : i32
    %31 = arith.addi %0, %c5_i32 : i32
    %32 = arith.index_cast %31 : i32 to index
    %33 = memref.load %arg1[%32] : memref<8xi32, #tpu.memory_space<smem>>
    %34 = arith.index_cast %33 : i32 to index
    %c0_10 = arith.constant 0 : index
    %35 = vector.load %arg2[%34, %c0_10] : memref<10x32xf32, #tpu.memory_space<vmem>>, vector<1x32xf32>
    %c5 = arith.constant 5 : index
    %c0_11 = arith.constant 0 : index
    %36 = vector.load %arg3[%c5, %c0_11] : memref<8x32xf32, #tpu.memory_space<vmem>>, vector<1x32xf32>
    tpu.vector_store %arg3[%c5, %c0_11], %35 {strides = array<i32>} : memref<8x32xf32, #tpu.memory_space<vmem>>, vector<1x32xf32>,
    %c6_i32 = arith.constant 6 : i32
    %37 = arith.addi %0, %c6_i32 : i32
    %38 = arith.index_cast %37 : i32 to index
    %39 = memref.load %arg1[%38] : memref<8xi32, #tpu.memory_space<smem>>
    %40 = arith.index_cast %39 : i32 to index
    %c0_12 = arith.constant 0 : index
    %41 = vector.load %arg2[%40, %c0_12] : memref<10x32xf32, #tpu.memory_space<vmem>>, vector<1x32xf32>
    %c6 = arith.constant 6 : index
    %c0_13 = arith.constant 0 : index
    %42 = vector.load %arg3[%c6, %c0_13] : memref<8x32xf32, #tpu.memory_space<vmem>>, vector<1x32xf32>
    tpu.vector_store %arg3[%c6, %c0_13], %41 {strides = array<i32>} : memref<8x32xf32, #tpu.memory_space<vmem>>, vector<1x32xf32>,
    %c7_i32 = arith.constant 7 : i32
    %43 = arith.addi %0, %c7_i32 : i32
    %44 = arith.index_cast %43 : i32 to index
    %45 = memref.load %arg1[%44] : memref<8xi32, #tpu.memory_space<smem>>
    %46 = arith.index_cast %45 : i32 to index
    %c0_14 = arith.constant 0 : index
    %47 = vector.load %arg2[%46, %c0_14] : memref<10x32xf32, #tpu.memory_space<vmem>>, vector<1x32xf32>
    %c7 = arith.constant 7 : index
    %c0_15 = arith.constant 0 : index
    %48 = vector.load %arg3[%c7, %c0_15] : memref<8x32xf32, #tpu.memory_space<vmem>>, vector<1x32xf32>
    tpu.vector_store %arg3[%c7, %c0_15], %47 {strides = array<i32>} : memref<8x32xf32, #tpu.memory_space<vmem>>, vector<1x32xf32>,
    return
  }
  func.func @transform_0(%arg0: i32, %arg1: memref<8xi32, #tpu.memory_space<smem>>) -> (i32, i32) {
    %c0_i32 = arith.constant 0 : i32
    %c0_i32_0 = arith.constant 0 : i32
    %c0_i32_1 = arith.constant 0 : i32
    return %c0_i32, %c0_i32_0 : i32, i32
  }
  func.func @transform_1(%arg0: i32, %arg1: memref<8xi32, #tpu.memory_space<smem>>) -> (i32, i32) {
    %c0_i32 = arith.constant 0 : i32
    %c0_i32_0 = arith.constant 0 : i32
    return %arg0, %c0_i32 : i32, i32
  }
}

</mosaic_0001>

<llo_original>
// kernel: tpu_custom_call.1
$region0: #{tpu_custom_call.1}
  #allocation0 [shape = 'u32[]', space=smem, size = 0x4, offset = 0x4, fixed_abs, tag = 'smem constant byte address 0x4 - core index']
  #allocation1 [shape = 'u32[144,128]{1,0:T(1,128)}', space=vmem, size = 0x12000, scoped, tag = 'internal scratch']
  #allocation2 [shape = 's32[1]{0}', space=sflag, size = 0x4, scoped, tag = 'scoped memory for tpu_custom_call.1']
  #allocation3 [shape = 'u8[512]{0}', space=smem, size = 0x200, scoped, tag = 'prefetched SMEM operand 0']
  %s0 = inlined_call_operand.hbm [shape: s32[8], index: 0, kind: input, shape index: {}]
  %s1 = inlined_call_operand.hbm [shape: f32[10,32], index: 1, kind: input, shape index: {}]
  %s2 = inlined_call_operand.hbm [shape: f32[8,32], index: 2, kind: output, shape index: {}]
  %s3 = sld [smem:[#allocation0]]
  $region18: #{tpu_custom_call.1} parent=0
    _
  %s5 = ssub.s32 1, %s3
  %s6 = scalar_select 0, %s5, %s3
  %8 = dma.hbm_to_smem %s0, 16, [#allocation3], [#allocation2]
  %9 = dma.done [#allocation2], 16
  %10 = sfence
  $region1: #{tpu_custom_call.1} parent=0
    #allocation4 [shape = 'u8[8192]{0}', space=vmem, size = 0x2000, scoped, tag = 'input window, operand 1, single buffered']
    #allocation5 [shape = 's32[1]{0}', space=sflag, size = 0x4, scoped, tag = 'scoped memory for tpu_custom_call.1']
    #allocation6 [shape = 's32[1]{0}', space=sflag, size = 0x4, scoped, tag = 'scoped memory for tpu_custom_call.1']
    #allocation7 [shape = 'u8[4096]{0}', space=vmem, size = 0x1000, scoped, tag = 'output window, operand 0, single buffered']
    %11 = vsyncpa [#allocation5], 0
    %12 = vsyncpa [#allocation6], 0
    // Predicated region
    $region2: #{tpu_custom_call.1} parent=1 // pred_check
      _
    $region3: #{tpu_custom_call.1} parent=1 // pred_check_branch
      %14 = sbr.rel (0) target = $region5
    $region4: #{tpu_custom_call.1} parent=1 // pred_region
      %s16 = ssub.s32 256, 256
      %17 = vsyncadd [#allocation5], %s16
      %s18 = sshll.u32 [#allocation4], 4
      %s19 = int_to_ptr.vmem [resolvable:$true] %s18
      %24 = dma.hbm_to_vmem [thread:$0]  %s1, 256, %s19, [#allocation5], 128, 128, 8
    $region5: #{tpu_custom_call.1} parent=1 // pred_fallthru
      _
    // Predicated region
    $region6: #{tpu_custom_call.1} parent=1 // pred_check
      _
    $region7: #{tpu_custom_call.1} parent=1 // pred_check_branch
      %26 = sbr.rel (0) target = $region9
    $region8: #{tpu_custom_call.1} parent=1 // pred_region
      %27 = dma.done [#allocation5], 256
    $region9: #{tpu_custom_call.1} parent=1 // pred_fallthru
      _
    %s28 = smul.u32 0, 8
    %s29 = sld [smem:[#allocation3 + %s28]]
    %s30 = scalar_lea.vmem [#allocation4], %s29
    %v31 = vld [vmem:[%s30] sm:$0x1]
    %vm32 = vcmask 253952
    %33 = vst.msk [vmem:[#allocation7] sm:$0x1] %vm32, %v31
    %s34 = sadd.s32 %s28, 1
    %s35 = sld [smem:[#allocation3 + %s34]]
    %s36 = scalar_lea.vmem [#allocation4], %s35
    %v37 = vld [vmem:[%s36] sm:$0x1]
    %38 = vst.msk [vmem:[#allocation7 + $0x1] sm:$0x1] %vm32, %v37
    %s39 = sadd.s32 %s28, 2
    %s40 = sld [smem:[#allocation3 + %s39]]
    %s41 = scalar_lea.vmem [#allocation4], %s40
    %v42 = vld [vmem:[%s41] sm:$0x1]
    %43 = vst.msk [vmem:[#allocation7 + $0x2] sm:$0x1] %vm32, %v42
    %s44 = sadd.s32 %s28, 3
    %s45 = sld [smem:[#allocation3 + %s44]]
    %s46 = scalar_lea.vmem [#allocation4], %s45
    %v47 = vld [vmem:[%s46] sm:$0x1]
    %48 = vst.msk [vmem:[#allocation7 + $0x3] sm:$0x1] %vm32, %v47
    %s49 = sadd.s32 %s28, 4
    %s50 = sld [smem:[#allocation3 + %s49]]
    %s51 = scalar_lea.vmem [#allocation4], %s50
    %v52 = vld [vmem:[%s51] sm:$0x1]
    %53 = vst.msk [vmem:[#allocation7 + $0x4] sm:$0x1] %vm32, %v52
    %s54 = sadd.s32 %s28, 5
    %s55 = sld [smem:[#allocation3 + %s54]]
    %s56 = scalar_lea.vmem [#allocation4], %s55
    %v57 = vld [vmem:[%s56] sm:$0x1]
    %58 = vst.msk [vmem:[#allocation7 + $0x5] sm:$0x1] %vm32, %v57
    %s59 = sadd.s32 %s28, 6
    %s60 = sld [smem:[#allocation3 + %s59]]
    %s61 = scalar_lea.vmem [#allocation4], %s60
    %v62 = vld [vmem:[%s61] sm:$0x1]
    %63 = vst.msk [vmem:[#allocation7 + $0x6] sm:$0x1] %vm32, %v62
    %s64 = sadd.s32 %s28, 7
    %s65 = sld [smem:[#allocation3 + %s64]]
    %s66 = scalar_lea.vmem [#allocation4], %s65
    %v67 = vld [vmem:[%s66] sm:$0x1]
    %68 = vst.msk [vmem:[#allocation7 + $0x7] sm:$0x1] %vm32, %v67
    // Predicated region
    $region10: #{tpu_custom_call.1} parent=1 // pred_check
      _
    $region11: #{tpu_custom_call.1} parent=1 // pred_check_branch
      %70 = sbr.rel (0) target = $region13
    $region12: #{tpu_custom_call.1} parent=1 // pred_region
      %s72 = ssub.s32 128, 128
      %73 = vsyncadd [#allocation6], %s72
      %s75 = sshll.u32 [#allocation7], 4
      %s76 = int_to_ptr.vmem [resolvable:$true] %s75
      %78 = dma.vmem_to_hbm [thread:$0]  %s76, 128, %s2, [#allocation6]
    $region13: #{tpu_custom_call.1} parent=1 // pred_fallthru
      _
    // Predicated region
    $region14: #{tpu_custom_call.1} parent=1 // pred_check
      _
    $region15: #{tpu_custom_call.1} parent=1 // pred_check_branch
      %80 = sbr.rel (0) target = $region17
    $region16: #{tpu_custom_call.1} parent=1 // pred_region
      %81 = dma.done [#allocation6], 128
    $region17: #{tpu_custom_call.1} parent=1 // pred_fallthru
      _
    %82 = vsyncpa [#allocation5], 1
    %83 = vsyncpa [#allocation6], 1

</llo_original>
